<compile_context>
chip_gen: v5e
topology: v5e:2x2
jax: 0.10.0
libtpu: 0.0.40
codegen_flags: <defaults>
</compile_context>

<pallas_src>
import jax
import jax.numpy as jnp
from jax.experimental import pallas as pl
from jax.experimental.pallas import tpu as pltpu

_LANE_CANDIDATES = (2048, 1024, 512, 256, 128)
_TARGET_BLOCK_BYTES = 2 * 1024 * 1024   # ~2 MiB per block
_MIN_PALLAS_ELEMS = 1024                # below this, plain XLA fusion wins
_VMEM_LIMIT_BYTES = 32 * 1024 * 1024    # explicit; safe on v5e/v6e/v7x


def _laplace_density_kernel(alpha_ref, sdf_ref, out_ref):
    # alpha_ref: SMEM scalar (1,);  sdf_ref/out_ref: VMEM tiles [block_rows, L]
    alpha = alpha_ref[0]
    half_alpha = 0.5 * alpha
    neg_inv_beta = -alpha                      # scalar; no per-element divide
    x = sdf_ref[...]
    e = jnp.exp(jnp.abs(x) * neg_inv_beta)     # single EUP op per vreg
    out_ref[...] = jnp.where(x >= 0, half_alpha * e, alpha - half_alpha * e)


def laplace_density_pallas(sdf2d, alpha, *, block_rows):
    """sdf2d: [R, L] f32 (L a multiple of 128), alpha: (1,) f32 -> density [R, L]."""
    R, L = sdf2d.shape
    grid = (pl.cdiv(R, block_rows),)
    return pl.pallas_call(
        _laplace_density_kernel,
        out_shape=jax.ShapeDtypeStruct((R, L), sdf2d.dtype),
        grid_spec=pltpu.PrefetchScalarGridSpec(
            num_scalar_prefetch=0,
            grid=grid,
            in_specs=[
                # scalar alpha in SMEM, same block every grid step
                pl.BlockSpec((1,), lambda i: (0,), memory_space=pltpu.SMEM),
                pl.BlockSpec((block_rows, L), lambda i: (i, 0)),
            ],
            out_specs=pl.BlockSpec((block_rows, L), lambda i: (i, 0)),
        ),
        compiler_params=pltpu.CompilerParams(
            dimension_semantics=("parallel",),
            vmem_limit_bytes=_VMEM_LIMIT_BYTES,
        ),
    )(alpha, sdf2d)


def _laplace_density_jnp(sdf, alpha):
    half_alpha = 0.5 * alpha
    e = jnp.exp(-jnp.abs(sdf) * alpha)
    return jnp.where(sdf >= 0, half_alpha * e, alpha - half_alpha * e)


class LaplaceDensityJAX:
    """JAX/Pallas port of the PyTorch LaplaceDensity module (forward only)."""

    def __init__(self, init_val, beta_min=0.0001):
        # TODO(synk): beta is a learnable nn.Parameter in torch; only the
        # deterministic forward pass (no autograd/optimizer state) is ported.
        self.beta_min = jnp.full((1,), beta_min, dtype=jnp.float32)
        self.beta = jnp.full((1,), init_val, dtype=jnp.float32)

    def get_beta(self):
        return jnp.abs(self.beta) + self.beta_min

    def __call__(self, sdf, beta=None):
        if beta is None:
            beta = self.get_beta()
        beta = jnp.asarray(beta, dtype=jnp.float32).reshape(-1)[:1]
        alpha = 1.0 / beta                      # scalar precompute, shape (1,)

        sdf = jnp.asarray(sdf, dtype=jnp.float32)
        orig_shape = sdf.shape
        total = sdf.size

        # Tiny inputs: pallas_call launch + glue dominates -> plain jnp.
        if total < _MIN_PALLAS_ELEMS:
            return _laplace_density_jnp(sdf, alpha[0])

        flat = sdf.reshape(-1)
        lanes = next((l for l in _LANE_CANDIDATES if total % l == 0), None)
        if lanes is None:
            # Ragged element count: pad only the tail up to the next multiple
            # of 128 (the common lane-aligned case above needs no pad copy).
            lanes = 128
            flat = jnp.pad(flat, (0, (-total) % 128))
        x2d = flat.reshape(-1, lanes)
        rows = x2d.shape[0]

        # ~2 MiB row block; target_rows is always a multiple of 8, and when
        # the whole array is smaller we use the full (legal) row extent.
        target_rows = max(8, _TARGET_BLOCK_BYTES // (lanes * 4))
        block_rows = rows if rows <= target_rows else target_rows

        out2d = laplace_density_pallas(x2d, alpha, block_rows=block_rows)
        return out2d.reshape(-1)[:total].reshape(orig_shape)


def _reference(sdf, beta):
    # Literal transcription of the torch forward.
    alpha = 1.0 / beta
    return alpha * (0.5 + 0.5 * jnp.sign(sdf) * jnp.expm1(-jnp.abs(sdf) / beta))


if __name__ == "__main__":
    key = jax.random.PRNGKey(0)
    model = LaplaceDensityJAX(init_val=0.1, beta_min=0.0001)

    # Main check: small batch of per-ray-sample SDF values through the kernel
    # path (2*64*128 = 16384 elems -> lane-dense [8, 2048] block).
    sdf = jax.random.normal(key, (2, 64, 128), dtype=jnp.float32) * 0.5
    density = jax.block_until_ready(model(sdf))
    ref = _reference(sdf, model.get_beta()[0])
    assert density.shape == sdf.shape
    assert jnp.allclose(density, ref, rtol=1e-5, atol=1e-5), "mismatch (learned beta)"

    # Explicit-beta path.
    density2 = jax.block_until_ready(model(sdf, beta=jnp.float32(0.05)))
    ref2 = _reference(sdf, jnp.float32(0.05))
    assert jnp.allclose(density2, ref2, rtol=1e-5, atol=1e-5), "mismatch (explicit beta)"

    # Multi-step grid with a partial (masked) last block, exercised directly.
    x2d = jax.random.normal(jax.random.PRNGKey(1), (20, 128), dtype=jnp.float32) * 0.3
    alpha = 1.0 / model.get_beta()
    out2d = jax.block_until_ready(laplace_density_pallas(x2d, alpha, block_rows=8))
    assert jnp.allclose(out2d, _reference(x2d, model.get_beta()[0]),
                        rtol=1e-5, atol=1e-5), "mismatch (partial last block)"

    # Tiny-input fast path (plain jnp, no pallas_call).
    sdf_small = jax.random.normal(key, (2, 8, 16), dtype=jnp.float32) * 0.5
    d_small = jax.block_until_ready(model(sdf_small))
    assert jnp.allclose(d_small, _reference(sdf_small, model.get_beta()[0]),
                        rtol=1e-5, atol=1e-5), "mismatch (small-input fast path)"

    print("KERNEL_OK")
</pallas_src>

<mosaic_0001>
module attributes {stable_mosaic.version = 11 : i64} {
  func.func @_laplace_density_kernel(%arg0: i32, %arg1: memref<1xf32, #tpu.memory_space<smem>>, %arg2: memref<8x2048xf32, #tpu.memory_space<vmem>>, %arg3: memref<8x2048xf32, #tpu.memory_space<vmem>>) attributes {dimension_semantics = [#tpu.dimension_semantics<parallel>], iteration_bounds = array<i64: 1>, scalar_prefetch = 0 : i64, scratch_operands = 0 : i64, tpu.core_type = #tpu.core_type<tc>, window_params = [{transform_indices = @transform_0, window_bounds = array<i64: 1>}, {transform_indices = @transform_1, window_bounds = array<i64: 8, 2048>}, {transform_indices = @transform_2, window_bounds = array<i64: 8, 2048>}]} {
    %c0 = arith.constant 0 : index
    %0 = memref.load %arg1[%c0] : memref<1xf32, #tpu.memory_space<smem>>
    %cst = arith.constant 5.000000e-01 : f32
    %1 = arith.mulf %cst, %0 : f32
    %cst_0 = arith.constant 0.000000e+00 : f32
    %2 = arith.subf %cst_0, %0 : f32
    %c0_1 = arith.constant 0 : index
    %c0_2 = arith.constant 0 : index
    %3 = vector.load %arg2[%c0_1, %c0_2] : memref<8x2048xf32, #tpu.memory_space<vmem>>, vector<8x2048xf32>
    %4 = math.absf %3 : vector<8x2048xf32>
    %5 = vector.broadcast %2 : f32 to vector<8x2048xf32>
    %6 = arith.mulf %4, %5 : vector<8x2048xf32>
    %7 = math.exp %6 : vector<8x2048xf32>
    %cst_3 = arith.constant 0.000000e+00 : f32
    %8 = vector.broadcast %cst_3 : f32 to vector<8x2048xf32>
    %9 = arith.cmpf oge, %3, %8 : vector<8x2048xf32>
    %10 = vector.broadcast %1 : f32 to vector<8x2048xf32>
    %11 = arith.mulf %10, %7 : vector<8x2048xf32>
    %12 = vector.broadcast %1 : f32 to vector<8x2048xf32>
    %13 = arith.mulf %12, %7 : vector<8x2048xf32>
    %14 = vector.broadcast %0 : f32 to vector<8x2048xf32>
    %15 = arith.subf %14, %13 : vector<8x2048xf32>
    %16 = arith.select %9, %11, %15 : vector<8x2048xi1>, vector<8x2048xf32>
    %c0_4 = arith.constant 0 : index
    %c0_5 = arith.constant 0 : index
    %17 = vector.load %arg3[%c0_4, %c0_5] : memref<8x2048xf32, #tpu.memory_space<vmem>>, vector<8x2048xf32>
    tpu.vector_store %arg3[%c0_4, %c0_5], %16 {strides = array<i32>} : memref<8x2048xf32, #tpu.memory_space<vmem>>, vector<8x2048xf32>,
    return
  }
  func.func @transform_0(%arg0: i32) -> i32 {
    %c0_i32 = arith.constant 0 : i32
    %c0_i32_0 = arith.constant 0 : i32
    return %c0_i32 : i32
  }
  func.func @transform_1(%arg0: i32) -> (i32, i32) {
    %c0_i32 = arith.constant 0 : i32
    %c0_i32_0 = arith.constant 0 : i32
    return %arg0, %c0_i32 : i32, i32
  }
  func.func @transform_2(%arg0: i32) -> (i32, i32) {
    %c0_i32 = arith.constant 0 : i32
    %c0_i32_0 = arith.constant 0 : i32
    return %arg0, %c0_i32 : i32, i32
  }
}

</mosaic_0001>

<llo_original>
// kernel: tpu_custom_call.1
$region0: #{tpu_custom_call.1}
  #allocation0 [shape = 'u32[]', space=smem, size = 0x4, offset = 0x4, fixed_abs, tag = 'smem constant byte address 0x4 - core index']
  #allocation1 [shape = 'u32[72,128]{1,0:T(1,128)}', space=vmem, size = 0x9000, scoped, tag = 'internal scratch']
  #allocation2 [shape = 'f32[1]{0:T(128)S(6)}', space=smem, size = 0x200, scoped, tag = 'scoped memory for tpu_custom_call.1']
  %s0 = inlined_call_operand.<no memory space> [shape: f32[1], index: 0, kind: input, shape index: {}]
  %s1 = inlined_call_operand.hbm [shape: f32[8,2048], index: 1, kind: input, shape index: {}]
  %s2 = inlined_call_operand.hbm [shape: f32[8,2048], index: 2, kind: output, shape index: {}]
  %s3 = sld [smem:[#allocation0]]
  $region22: #{tpu_custom_call.1} parent=0
    _
  %s5 = ssub.s32 1, %s3
  %s6 = scalar_select 0, %s5, %s3
  %7 = sst [smem:[#allocation2]] %s0
  $region1: #{tpu_custom_call.1} parent=0
    #allocation3 [shape = 'u8[65536]{0}', space=vmem, size = 0x10000, scoped, tag = 'input window, operand 1, single buffered']
    #allocation4 [shape = 's32[1]{0}', space=sflag, size = 0x4, scoped, tag = 'scoped memory for tpu_custom_call.1']
    #allocation5 [shape = 's32[1]{0}', space=sflag, size = 0x4, scoped, tag = 'scoped memory for tpu_custom_call.1']
    #allocation6 [shape = 'u8[65536]{0}', space=vmem, size = 0x10000, scoped, tag = 'output window, operand 0, single buffered']
    %8 = vsyncpa [#allocation4], 0
    %9 = vsyncpa [#allocation5], 0
    // Predicated region
    $region2: #{tpu_custom_call.1} parent=1 // pred_check
      _
    $region3: #{tpu_custom_call.1} parent=1 // pred_check_branch
      %11 = sbr.rel (0) target = $region5
    $region4: #{tpu_custom_call.1} parent=1 // pred_region
      _
    $region5: #{tpu_custom_call.1} parent=1 // pred_fallthru
      _
    // Predicated region
    $region6: #{tpu_custom_call.1} parent=1 // pred_check
      _
    $region7: #{tpu_custom_call.1} parent=1 // pred_check_branch
      %13 = sbr.rel (0) target = $region9
    $region8: #{tpu_custom_call.1} parent=1 // pred_region
      %15 = vsyncadd [#allocation4], 0
      %s17 = sshll.u32 %s1, 4
      %s18 = int_to_ptr.hbm [resolvable:$true] %s17
      %s19 = sshll.u32 [#allocation3], 4
      %s20 = int_to_ptr.vmem [resolvable:$true] %s19
      %22 = dma.hbm_to_vmem [thread:$0]  %s18, 2048, %s20, [#allocation4]
    $region9: #{tpu_custom_call.1} parent=1 // pred_fallthru
      _
    // Predicated region
    $region10: #{tpu_custom_call.1} parent=1 // pred_check
      _
    $region11: #{tpu_custom_call.1} parent=1 // pred_check_branch
      %24 = sbr.rel (0) target = $region13
    $region12: #{tpu_custom_call.1} parent=1 // pred_region
      %26 = dma.done [#allocation4], 2048
    $region13: #{tpu_custom_call.1} parent=1 // pred_fallthru
      _
    %s27 = sld [smem:[#allocation2]]
    %s28 = smul.f32 %s27, 0.5
    %s29 = ssub.f32 0.0, %s27
    %v30 = vld [vmem:[#allocation3] sm:$0xff]
    %v31 = vld [vmem:[#allocation3 + $0x8] sm:$0xff]
    %v32 = vld [vmem:[#allocation3 + $0x10] sm:$0xff]
    %v33 = vld [vmem:[#allocation3 + $0x18] sm:$0xff]
    %v34 = vld [vmem:[#allocation3 + $0x20] sm:$0xff]
    %v35 = vld [vmem:[#allocation3 + $0x28] sm:$0xff]
    %v36 = vld [vmem:[#allocation3 + $0x30] sm:$0xff]
    %v37 = vld [vmem:[#allocation3 + $0x38] sm:$0xff]
    %v38 = vld [vmem:[#allocation3 + $0x40] sm:$0xff]
    %v39 = vld [vmem:[#allocation3 + $0x48] sm:$0xff]
    %v40 = vld [vmem:[#allocation3 + $0x50] sm:$0xff]
    %v41 = vld [vmem:[#allocation3 + $0x58] sm:$0xff]
    %v42 = vld [vmem:[#allocation3 + $0x60] sm:$0xff]
    %v43 = vld [vmem:[#allocation3 + $0x68] sm:$0xff]
    %v44 = vld [vmem:[#allocation3 + $0x70] sm:$0xff]
    %v45 = vld [vmem:[#allocation3 + $0x78] sm:$0xff]
    %v46 = vand.u32 2147483647, %v30
    %v47 = vand.u32 2147483647, %v31
    %v48 = vand.u32 2147483647, %v32
    %v49 = vand.u32 2147483647, %v33
    %v50 = vand.u32 2147483647, %v34
    %v51 = vand.u32 2147483647, %v35
    %v52 = vand.u32 2147483647, %v36
    %v53 = vand.u32 2147483647, %v37
    %v54 = vand.u32 2147483647, %v38
    %v55 = vand.u32 2147483647, %v39
    %v56 = vand.u32 2147483647, %v40
    %v57 = vand.u32 2147483647, %v41
    %v58 = vand.u32 2147483647, %v42
    %v59 = vand.u32 2147483647, %v43
    %v60 = vand.u32 2147483647, %v44
    %v61 = vand.u32 2147483647, %v45
    %v62 = vstv %s29
    %v63 = vmul.f32 %v46, %v62
    %v64 = vmul.f32 %v47, %v62
    %v65 = vmul.f32 %v48, %v62
    %v66 = vmul.f32 %v49, %v62
    %v67 = vmul.f32 %v50, %v62
    %v68 = vmul.f32 %v51, %v62
    %v69 = vmul.f32 %v52, %v62
    %v70 = vmul.f32 %v53, %v62
    %v71 = vmul.f32 %v54, %v62
    %v72 = vmul.f32 %v55, %v62
    %v73 = vmul.f32 %v56, %v62
    %v74 = vmul.f32 %v57, %v62
    %v75 = vmul.f32 %v58, %v62
    %v76 = vmul.f32 %v59, %v62
    %v77 = vmul.f32 %v60, %v62
    %v78 = vmul.f32 %v61, %v62
    %v79 = vmul.f32 %v63, 1.442695
    %v80 = vpow.pop %v79
    %v81 = vmul.f32 %v64, 1.442695
    %v82 = vpow.pop %v81
    %v83 = vmul.f32 %v65, 1.442695
    %v84 = vpow.pop %v83
    %v85 = vmul.f32 %v66, 1.442695
    %v86 = vpow.pop %v85
    %v87 = vmul.f32 %v67, 1.442695
    %v88 = vpow.pop %v87
    %v89 = vmul.f32 %v68, 1.442695
    %v90 = vpow.pop %v89
    %v91 = vmul.f32 %v69, 1.442695
    %v92 = vpow.pop %v91
    %v93 = vmul.f32 %v70, 1.442695
    %v94 = vpow.pop %v93
    %v95 = vmul.f32 %v71, 1.442695
    %v96 = vpow.pop %v95
    %v97 = vmul.f32 %v72, 1.442695
    %v98 = vpow.pop %v97
    %v99 = vmul.f32 %v73, 1.442695
    %v100 = vpow.pop %v99
    %v101 = vmul.f32 %v74, 1.442695
    %v102 = vpow.pop %v101
    %v103 = vmul.f32 %v75, 1.442695
    %v104 = vpow.pop %v103
    %v105 = vmul.f32 %v76, 1.442695
    %v106 = vpow.pop %v105
    %v107 = vmul.f32 %v77, 1.442695
    %v108 = vpow.pop %v107
    %v109 = vmul.f32 %v78, 1.442695
    %v110 = vpow.pop %v109
    %vm111 = vcmp.ge.f32.partialorder %v30, 0.0
    %vm112 = vcmp.ge.f32.partialorder %v31, 0.0
    %vm113 = vcmp.ge.f32.partialorder %v32, 0.0
    %vm114 = vcmp.ge.f32.partialorder %v33, 0.0
    %vm115 = vcmp.ge.f32.partialorder %v34, 0.0
    %vm116 = vcmp.ge.f32.partialorder %v35, 0.0
    %vm117 = vcmp.ge.f32.partialorder %v36, 0.0
    %vm118 = vcmp.ge.f32.partialorder %v37, 0.0
    %vm119 = vcmp.ge.f32.partialorder %v38, 0.0
    %vm120 = vcmp.ge.f32.partialorder %v39, 0.0
    %vm121 = vcmp.ge.f32.partialorder %v40, 0.0
    %vm122 = vcmp.ge.f32.partialorder %v41, 0.0
    %vm123 = vcmp.ge.f32.partialorder %v42, 0.0
    %vm124 = vcmp.ge.f32.partialorder %v43, 0.0
    %vm125 = vcmp.ge.f32.partialorder %v44, 0.0
    %vm126 = vcmp.ge.f32.partialorder %v45, 0.0
    %v127 = vstv %s28
    %v128 = vmul.f32 %v127, %v80
    %v129 = vmul.f32 %v127, %v82
    %v130 = vmul.f32 %v127, %v84
    %v131 = vmul.f32 %v127, %v86
    %v132 = vmul.f32 %v127, %v88
    %v133 = vmul.f32 %v127, %v90
    %v134 = vmul.f32 %v127, %v92
    %v135 = vmul.f32 %v127, %v94
    %v136 = vmul.f32 %v127, %v96
    %v137 = vmul.f32 %v127, %v98
    %v138 = vmul.f32 %v127, %v100
    %v139 = vmul.f32 %v127, %v102
    %v140 = vmul.f32 %v127, %v104
    %v141 = vmul.f32 %v127, %v106
    %v142 = vmul.f32 %v127, %v108
    %v143 = vmul.f32 %v127, %v110
    %v144 = vstv %s27
    %v145 = vsub.f32 %v144, %v128
    %v146 = vsub.f32 %v144, %v129
    %v147 = vsub.f32 %v144, %v130
    %v148 = vsub.f32 %v144, %v131
    %v149 = vsub.f32 %v144, %v132
    %v150 = vsub.f32 %v144, %v133
    %v151 = vsub.f32 %v144, %v134
    %v152 = vsub.f32 %v144, %v135
    %v153 = vsub.f32 %v144, %v136
    %v154 = vsub.f32 %v144, %v137
    %v155 = vsub.f32 %v144, %v138
    %v156 = vsub.f32 %v144, %v139
    %v157 = vsub.f32 %v144, %v140
    %v158 = vsub.f32 %v144, %v141
    %v159 = vsub.f32 %v144, %v142
    %v160 = vsub.f32 %v144, %v143
    %v161 = vsel %vm111, %v128, %v145
    %v162 = vsel %vm112, %v129, %v146
    %v163 = vsel %vm113, %v130, %v147
    %v164 = vsel %vm114, %v131, %v148
    %v165 = vsel %vm115, %v132, %v149
    %v166 = vsel %vm116, %v133, %v150
    %v167 = vsel %vm117, %v134, %v151
    %v168 = vsel %vm118, %v135, %v152
    %v169 = vsel %vm119, %v136, %v153
    %v170 = vsel %vm120, %v137, %v154
    %v171 = vsel %vm121, %v138, %v155
    %v172 = vsel %vm122, %v139, %v156
    %v173 = vsel %vm123, %v140, %v157
    %v174 = vsel %vm124, %v141, %v158
    %v175 = vsel %vm125, %v142, %v159
    %v176 = vsel %vm126, %v143, %v160
    %177 = vst [vmem:[#allocation6] sm:$0xff] %v161
    %178 = vst [vmem:[#allocation6 + $0x8] sm:$0xff] %v162
    %179 = vst [vmem:[#allocation6 + $0x10] sm:$0xff] %v163
    %180 = vst [vmem:[#allocation6 + $0x18] sm:$0xff] %v164
    %181 = vst [vmem:[#allocation6 + $0x20] sm:$0xff] %v165
    %182 = vst [vmem:[#allocation6 + $0x28] sm:$0xff] %v166
    %183 = vst [vmem:[#allocation6 + $0x30] sm:$0xff] %v167
    %184 = vst [vmem:[#allocation6 + $0x38] sm:$0xff] %v168
    %185 = vst [vmem:[#allocation6 + $0x40] sm:$0xff] %v169
    %186 = vst [vmem:[#allocation6 + $0x48] sm:$0xff] %v170
    %187 = vst [vmem:[#allocation6 + $0x50] sm:$0xff] %v171
    %188 = vst [vmem:[#allocation6 + $0x58] sm:$0xff] %v172
    %189 = vst [vmem:[#allocation6 + $0x60] sm:$0xff] %v173
    %190 = vst [vmem:[#allocation6 + $0x68] sm:$0xff] %v174
    %191 = vst [vmem:[#allocation6 + $0x70] sm:$0xff] %v175
    %192 = vst [vmem:[#allocation6 + $0x78] sm:$0xff] %v176
    // Predicated region
    $region14: #{tpu_custom_call.1} parent=1 // pred_check
      _
    $region15: #{tpu_custom_call.1} parent=1 // pred_check_branch
      %194 = sbr.rel (0) target = $region17
    $region16: #{tpu_custom_call.1} parent=1 // pred_region
      %196 = vsyncadd [#allocation5], 0
      %s198 = sshll.u32 [#allocation6], 4
      %s199 = int_to_ptr.vmem [resolvable:$true] %s198
      %s200 = sshll.u32 %s2, 4
      %s201 = int_to_ptr.hbm [resolvable:$true] %s200
      %203 = dma.vmem_to_hbm [thread:$0]  %s199, 2048, %s201, [#allocation5]
    $region17: #{tpu_custom_call.1} parent=1 // pred_fallthru
      _
    // Predicated region
    $region18: #{tpu_custom_call.1} parent=1 // pred_check
      _
    $region19: #{tpu_custom_call.1} parent=1 // pred_check_branch
      %205 = sbr.rel (0) target = $region21
    $region20: #{tpu_custom_call.1} parent=1 // pred_region
      %207 = dma.done [#allocation5], 2048
    $region21: #{tpu_custom_call.1} parent=1 // pred_fallthru
      _
    %208 = vsyncpa [#allocation4], 1
    %209 = vsyncpa [#allocation5], 1

</llo_original>
